<compile_context>
chip_gen: v7x
topology: tpu7x:2x2x1
jax: 0.10.0
libtpu: 0.0.40
codegen_flags: <defaults>
</compile_context>

<pallas_src>
import functools
import math

import jax
import jax.numpy as jnp
from jax.experimental import pallas as pl
from jax.experimental.pallas import tpu as pltpu

_LOG_2PI = math.log(2.0 * math.pi)
HIDDEN = 64


def _round_up(x, m):
    return ((x + m - 1) // m) * m


@functools.lru_cache(maxsize=1)
def _bf16_eltwise_supported():
    """bf16 EUP/VPU (bf16 tanh) exists on v6e / v7x; v5e and older stay f32."""
    try:
        kind = jax.devices()[0].device_kind.lower()
    except Exception:
        return False
    return ("v6" in kind) or ("v7" in kind) or ("7x" in kind)


def _choose_batch_tile(b, block_b):
    """Batch tile: multiple of 8 sublanes; large tiles for big batches (fewer
    fixed-overhead grid steps) but >= 2 steps so v7x's 2 TensorCores are used."""
    if b <= 256:
        return min(_round_up(b, 8), _round_up(block_b, 8))
    tb = min(_round_up(block_b, 128), _round_up(pl.cdiv(b, 2), 128))
    return max(tb, 128)


# -----------------------------------------------------------------------------
# Kernel
# -----------------------------------------------------------------------------
def _actor_critic_kernel(
    state_ref, action_ref,
    w1_ref, b1_ref, w2_ref, b2_ref, w3_ref, b3_ref, mvn_ref,
    out_ref,
    *, act_dtype,
):
    a = action_ref.shape[-1]

    # In-VPU bf16 cast of the state tile (HBM stream stays f32).
    x = state_ref[...].astype(jnp.bfloat16)                              # [TB, S]

    # Fused actor+critic MLP: 3 MXU matmuls on full 128-wide activations.
    # Hidden tanh in `act_dtype` (bf16 on v6e/v7x, f32 on v5e); matmuls bf16,
    # accumulation f32.
    h = jnp.dot(x, w1_ref[...], preferred_element_type=jnp.float32) + b1_ref[...]
    h = jnp.tanh(h.astype(act_dtype))                                    # [TB, 128]
    h = (jnp.dot(h.astype(jnp.bfloat16), w2_ref[...],
                 preferred_element_type=jnp.float32) + b2_ref[...])
    h = jnp.tanh(h.astype(act_dtype))                                    # [TB, 128]
    z = (jnp.dot(h.astype(jnp.bfloat16), w3_ref[...],
                 preferred_element_type=jnp.float32) + b3_ref[...])      # [TB, A+1]

    mean = jnp.tanh(z[:, :a])                                            # f32 MVN mean
    value = z[:, a:a + 1]                                                # critic value

    # MultivariateNormal(loc=mean, cov=diag(var)) log-prob, all in f32.
    # mvn = [inv_var_0..inv_var_{A-1}, logp_const] with
    # logp_const = -0.5*(sum(log var) + A*log(2*pi)), precomputed at pack time.
    mvn = mvn_ref[...]                                                   # [1, A+1]
    inv_var = mvn[:, :a]
    logp_const = mvn[:, a:a + 1]
    diff = action_ref[...] - mean
    quad = jnp.sum(diff * diff * inv_var, axis=-1, keepdims=True)        # [TB, 1]
    logp = logp_const - 0.5 * quad

    # Packed output: col 0 = log-prob, col 1 = state value.
    # Two direct slice stores (no concat / lane shift of the value column).
    out_ref[:, 0:1] = logp
    out_ref[:, 1:2] = value


# -----------------------------------------------------------------------------
# Param packing (done once, outside the kernel)
# -----------------------------------------------------------------------------
def pack_params(params):
    """Fuse actor+critic weights into one 128-wide path and precompute MVN consts."""
    h = HIDDEN
    a = params["w3a"].shape[1]

    w1 = jnp.concatenate([params["w1a"], params["w1c"]], axis=1)        # [S, 128]
    b1 = jnp.concatenate([params["b1a"], params["b1c"]], axis=1)        # [1, 128]
    zhh = jnp.zeros((h, h), jnp.float32)
    w2 = jnp.block([[params["w2a"], zhh], [zhh, params["w2c"]]])        # [128, 128]
    b2 = jnp.concatenate([params["b2a"], params["b2c"]], axis=1)        # [1, 128]
    w3 = jnp.block([[params["w3a"], jnp.zeros((h, 1), jnp.float32)],
                    [jnp.zeros((h, a), jnp.float32), params["w3c"]]])   # [128, A+1]
    b3 = jnp.concatenate([params["b3a"], params["b3c"]], axis=1)        # [1, A+1]

    var = params["var"]                                                 # [1, A]
    inv_var = 1.0 / var
    logdet = jnp.sum(jnp.log(var))
    logp_const = -0.5 * (logdet + a * _LOG_2PI)
    mvn = jnp.concatenate(
        [inv_var, jnp.reshape(logp_const, (1, 1))], axis=1)             # [1, A+1]
    entropy = 0.5 * a * (1.0 + _LOG_2PI) + 0.5 * logdet                 # scalar

    return {
        "w1": w1.astype(jnp.bfloat16), "b1": b1,
        "w2": w2.astype(jnp.bfloat16), "b2": b2,
        "w3": w3.astype(jnp.bfloat16), "b3": b3,
        "mvn": mvn.astype(jnp.float32),
        "entropy": entropy.astype(jnp.float32),
    }


# -----------------------------------------------------------------------------
# Wrapper
# -----------------------------------------------------------------------------
@functools.partial(jax.jit, static_argnames=("block_b",))
def evaluate(packed, state, action, *, block_b=2048):
    """Pallas equivalent of ActorCritic.evaluate (continuous action space)."""
    b, s = state.shape
    a = action.shape[1]

    tb = _choose_batch_tile(b, block_b)
    n_tiles = pl.cdiv(b, tb)

    act_dtype = jnp.bfloat16 if _bf16_eltwise_supported() else jnp.float32
    kernel = functools.partial(_actor_critic_kernel, act_dtype=act_dtype)

    resident = lambda arr: pl.BlockSpec(arr.shape, lambda i: (0, 0))

    # Advisory cost estimate: 3 fused matmuls + 2 full-width tanh layers.
    flops = 2 * b * (s * 2 * HIDDEN + (2 * HIDDEN) ** 2 + 2 * HIDDEN * (a + 1)) \
        + 8 * b * a
    transcendentals = b * (2 * 2 * HIDDEN + a)
    bytes_accessed = (
        4 * (state.size + action.size + 2 * b)
        + 2 * (packed["w1"].size + packed["w2"].size + packed["w3"].size)
        + 4 * (packed["b1"].size + packed["b2"].size + packed["b3"].size
               + packed["mvn"].size))

    out = pl.pallas_call(
        kernel,
        out_shape=jax.ShapeDtypeStruct((b, 2), jnp.float32),
        grid_spec=pltpu.PrefetchScalarGridSpec(
            num_scalar_prefetch=0,
            grid=(n_tiles,),
            in_specs=[
                pl.BlockSpec((tb, s), lambda i: (i, 0)),   # state tile (f32 in HBM)
                pl.BlockSpec((tb, a), lambda i: (i, 0)),   # action tile
                resident(packed["w1"]), resident(packed["b1"]),
                resident(packed["w2"]), resident(packed["b2"]),
                resident(packed["w3"]), resident(packed["b3"]),
                resident(packed["mvn"]),
            ],
            out_specs=pl.BlockSpec((tb, 2), lambda i: (i, 0)),
        ),
        compiler_params=pltpu.CompilerParams(
            dimension_semantics=("parallel",),
            vmem_limit_bytes=32 * 1024 * 1024,
        ),
        cost_estimate=pl.CostEstimate(
            flops=flops, transcendentals=transcendentals,
            bytes_accessed=bytes_accessed),
    )(state, action,
      packed["w1"], packed["b1"], packed["w2"], packed["b2"],
      packed["w3"], packed["b3"], packed["mvn"])

    logp = out[:, 0]
    value = out[:, 1:2]
    # Entropy depends only on var -> computed once at pack time, broadcast here.
    entropy = jnp.full((b,), packed["entropy"], jnp.float32)
    return logp, value, entropy


# TODO(synk): ActorCritic.act() additionally samples from the MVN; the RNG draw
# is left outside the kernel (mean + sqrt(var) * normal noise in plain JAX).


# -----------------------------------------------------------------------------
# Init + references
# -----------------------------------------------------------------------------
def init_params(key, state_dim, action_dim, hidden=HIDDEN):
    """Deterministic init mimicking nn.Linear default (uniform +-1/sqrt(fan_in))."""
    def linear(k, fan_in, fan_out):
        kw, kb = jax.random.split(k)
        bound = 1.0 / math.sqrt(fan_in)
        w = jax.random.uniform(kw, (fan_in, fan_out), jnp.float32, -bound, bound)
        b = jax.random.uniform(kb, (1, fan_out), jnp.float32, -bound, bound)
        return w, b

    ks = jax.random.split(key, 6)
    params = {}
    params["w1a"], params["b1a"] = linear(ks[0], state_dim, hidden)
    params["w2a"], params["b2a"] = linear(ks[1], hidden, hidden)
    params["w3a"], params["b3a"] = linear(ks[2], hidden, action_dim)
    params["w1c"], params["b1c"] = linear(ks[3], state_dim, hidden)
    params["w2c"], params["b2c"] = linear(ks[4], hidden, hidden)
    params["w3c"], params["b3c"] = linear(ks[5], hidden, 1)
    # actor_std = torch.ones(action_dim); used as the covariance diagonal.
    params["var"] = jnp.ones((1, action_dim), jnp.float32)
    return params


def _reference_f32(params, state, action):
    """Pure-JAX f32 reference of the original PyTorch module semantics."""
    h = jnp.tanh(state @ params["w1a"] + params["b1a"])
    h = jnp.tanh(h @ params["w2a"] + params["b2a"])
    mean = jnp.tanh(h @ params["w3a"] + params["b3a"])
    var = params["var"][0]
    d = mean.shape[-1]
    diff = action - mean
    logp = -0.5 * (jnp.sum(diff * diff / var, axis=-1)
                   + jnp.sum(jnp.log(var)) + d * _LOG_2PI)
    ent = jnp.full((state.shape[0],),
                   0.5 * d * (1.0 + _LOG_2PI) + 0.5 * jnp.sum(jnp.log(var)),
                   jnp.float32)
    hc = jnp.tanh(state @ params["w1c"] + params["b1c"])
    hc = jnp.tanh(hc @ params["w2c"] + params["b2c"])
    value = hc @ params["w3c"] + params["b3c"]
    return logp, value, ent


def _reference_matched(packed, state, action, act_dtype):
    """Reference mirroring the kernel's precision recipe (bf16 matmuls,
    hidden tanh in act_dtype, f32 log-prob math)."""
    a = action.shape[1]
    x = state.astype(jnp.bfloat16)
    h = jnp.dot(x, packed["w1"],
                preferred_element_type=jnp.float32) + packed["b1"]
    h = jnp.tanh(h.astype(act_dtype))
    h = jnp.dot(h.astype(jnp.bfloat16), packed["w2"],
                preferred_element_type=jnp.float32) + packed["b2"]
    h = jnp.tanh(h.astype(act_dtype))
    z = jnp.dot(h.astype(jnp.bfloat16), packed["w3"],
                preferred_element_type=jnp.float32) + packed["b3"]
    mean = jnp.tanh(z[:, :a])
    value = z[:, a:a + 1]
    inv_var = packed["mvn"][:, :a]
    logp_const = packed["mvn"][0, a]
    diff = action - mean
    logp = logp_const - 0.5 * jnp.sum(diff * diff * inv_var, axis=-1)
    ent = jnp.full((state.shape[0],), packed["entropy"], jnp.float32)
    return logp, value, ent


if __name__ == "__main__":
    B, STATE_DIM, ACTION_DIM = 8, 16, 4

    key = jax.random.PRNGKey(0)
    k_params, k_state, k_action = jax.random.split(key, 3)

    params = init_params(k_params, STATE_DIM, ACTION_DIM)
    packed = pack_params(params)
    state = jax.random.normal(k_state, (B, STATE_DIM), jnp.float32)
    action = jax.random.normal(k_action, (B, ACTION_DIM), jnp.float32)

    logp, value, ent = jax.block_until_ready(evaluate(packed, state, action))

    assert logp.shape == (B,) and value.shape == (B, 1) and ent.shape == (B,)

    # Check vs a reference using the same precision recipe as the kernel.
    act_dtype = jnp.bfloat16 if _bf16_eltwise_supported() else jnp.float32
    m_logp, m_value, m_ent = _reference_matched(packed, state, action, act_dtype)
    logp_tol, val_tol = (2e-3, 2e-3) if act_dtype == jnp.float32 else (1e-1, 2e-2)
    assert jnp.allclose(logp, m_logp, atol=logp_tol)
    assert jnp.allclose(value, m_value, atol=val_tol)
    assert jnp.allclose(ent, m_ent, atol=1e-5)

    # Looser sanity check vs the full-f32 PyTorch-semantics reference
    # (tolerance accounts for bf16 matmul operands / bf16 hidden tanh).
    r_logp, r_value, r_ent = _reference_f32(params, state, action)
    assert jnp.allclose(logp, r_logp, atol=0.35)
    assert jnp.allclose(value, r_value, atol=0.25)
    assert jnp.allclose(ent, r_ent, atol=1e-5)

    print("KERNEL_OK")
</pallas_src>

<mosaic_0001>
module attributes {stable_mosaic.version = 11 : i64} {
  func.func @_actor_critic_kernel(%arg0: i32, %arg1: memref<8x16xf32, #tpu.memory_space<vmem>>, %arg2: memref<8x4xf32, #tpu.memory_space<vmem>>, %arg3: memref<16x128xbf16, #tpu.memory_space<vmem>>, %arg4: memref<1x128xf32, #tpu.memory_space<vmem>>, %arg5: memref<128x128xbf16, #tpu.memory_space<vmem>>, %arg6: memref<1x128xf32, #tpu.memory_space<vmem>>, %arg7: memref<128x5xbf16, #tpu.memory_space<vmem>>, %arg8: memref<1x5xf32, #tpu.memory_space<vmem>>, %arg9: memref<1x5xf32, #tpu.memory_space<vmem>>, %arg10: memref<8x2xf32, #tpu.memory_space<vmem>>) attributes {dimension_semantics = [#tpu.dimension_semantics<parallel>], iteration_bounds = array<i64: 1>, scalar_prefetch = 0 : i64, scratch_operands = 0 : i64, tpu.core_type = #tpu.core_type<tc>, window_params = [{transform_indices = @transform_0, window_bounds = array<i64: 8, 16>}, {transform_indices = @transform_1, window_bounds = array<i64: 8, 4>}, {pipeline_mode = #tpu.pipeline_mode<synchronous>, transform_indices = @transform_2, window_bounds = array<i64: 16, 128>}, {pipeline_mode = #tpu.pipeline_mode<synchronous>, transform_indices = @transform_3, window_bounds = array<i64: 1, 128>}, {pipeline_mode = #tpu.pipeline_mode<synchronous>, transform_indices = @transform_4, window_bounds = array<i64: 128, 128>}, {pipeline_mode = #tpu.pipeline_mode<synchronous>, transform_indices = @transform_5, window_bounds = array<i64: 1, 128>}, {pipeline_mode = #tpu.pipeline_mode<synchronous>, transform_indices = @transform_6, window_bounds = array<i64: 128, 5>}, {pipeline_mode = #tpu.pipeline_mode<synchronous>, transform_indices = @transform_7, window_bounds = array<i64: 1, 5>}, {pipeline_mode = #tpu.pipeline_mode<synchronous>, transform_indices = @transform_8, window_bounds = array<i64: 1, 5>}, {transform_indices = @transform_9, window_bounds = array<i64: 8, 2>}]} {
    %c0 = arith.constant 0 : index
    %c0_0 = arith.constant 0 : index
    %0 = vector.load %arg1[%c0, %c0_0] : memref<8x16xf32, #tpu.memory_space<vmem>>, vector<8x16xf32>
    %1 = arith.truncf %0 : vector<8x16xf32> to vector<8x16xbf16>
    %c0_1 = arith.constant 0 : index
    %c0_2 = arith.constant 0 : index
    %2 = vector.load %arg3[%c0_1, %c0_2] : memref<16x128xbf16, #tpu.memory_space<vmem>>, vector<16x128xbf16>
    %cst = arith.constant dense<0.000000e+00> : vector<8x128xf32>
    %3 = tpu.matmul %1, %2, %cst {dimension_numbers = #tpu.dot_dimension_numbers<[1], [0], [0], [1], [0, 0, 1, 1], [], []>} : vector<8x16xbf16>, vector<16x128xbf16>, vector<8x128xf32> -> vector<8x128xf32>
    %c0_3 = arith.constant 0 : index
    %c0_4 = arith.constant 0 : index
    %4 = vector.load %arg4[%c0_3, %c0_4] : memref<1x128xf32, #tpu.memory_space<vmem>>, vector<1x128xf32>
    %5 = vector.broadcast %4 : vector<1x128xf32> to vector<8x128xf32>
    %6 = arith.addf %3, %5 : vector<8x128xf32>
    %7 = math.tanh %6 : vector<8x128xf32>
    %8 = arith.truncf %7 : vector<8x128xf32> to vector<8x128xbf16>
    %c0_5 = arith.constant 0 : index
    %c0_6 = arith.constant 0 : index
    %9 = vector.load %arg5[%c0_5, %c0_6] : memref<128x128xbf16, #tpu.memory_space<vmem>>, vector<128x128xbf16>
    %cst_7 = arith.constant dense<0.000000e+00> : vector<8x128xf32>
    %10 = tpu.matmul %8, %9, %cst_7 {dimension_numbers = #tpu.dot_dimension_numbers<[1], [0], [0], [1], [0, 0, 1, 1], [], []>} : vector<8x128xbf16>, vector<128x128xbf16>, vector<8x128xf32> -> vector<8x128xf32>
    %c0_8 = arith.constant 0 : index
    %c0_9 = arith.constant 0 : index
    %11 = vector.load %arg6[%c0_8, %c0_9] : memref<1x128xf32, #tpu.memory_space<vmem>>, vector<1x128xf32>
    %12 = vector.broadcast %11 : vector<1x128xf32> to vector<8x128xf32>
    %13 = arith.addf %10, %12 : vector<8x128xf32>
    %14 = math.tanh %13 : vector<8x128xf32>
    %15 = arith.truncf %14 : vector<8x128xf32> to vector<8x128xbf16>
    %c0_10 = arith.constant 0 : index
    %c0_11 = arith.constant 0 : index
    %16 = vector.load %arg7[%c0_10, %c0_11] : memref<128x5xbf16, #tpu.memory_space<vmem>>, vector<128x5xbf16>
    %cst_12 = arith.constant dense<0.000000e+00> : vector<8x5xf32>
    %17 = tpu.matmul %15, %16, %cst_12 {dimension_numbers = #tpu.dot_dimension_numbers<[1], [0], [0], [1], [0, 0, 1, 1], [], []>} : vector<8x128xbf16>, vector<128x5xbf16>, vector<8x5xf32> -> vector<8x5xf32>
    %c0_13 = arith.constant 0 : index
    %c0_14 = arith.constant 0 : index
    %18 = vector.load %arg8[%c0_13, %c0_14] : memref<1x5xf32, #tpu.memory_space<vmem>>, vector<1x5xf32>
    %19 = vector.broadcast %18 : vector<1x5xf32> to vector<8x5xf32>
    %20 = arith.addf %17, %19 : vector<8x5xf32>
    %21 = vector.extract_strided_slice %20 {offsets = [0, 0], sizes = [8, 4], strides = [1, 1]} : vector<8x5xf32> to vector<8x4xf32>
    %22 = math.tanh %21 : vector<8x4xf32>
    %23 = vector.extract_strided_slice %20 {offsets = [0, 4], sizes = [8, 1], strides = [1, 1]} : vector<8x5xf32> to vector<8x1xf32>
    %c0_15 = arith.constant 0 : index
    %c0_16 = arith.constant 0 : index
    %24 = vector.load %arg9[%c0_15, %c0_16] : memref<1x5xf32, #tpu.memory_space<vmem>>, vector<1x5xf32>
    %25 = vector.extract_strided_slice %24 {offsets = [0, 0], sizes = [1, 4], strides = [1, 1]} : vector<1x5xf32> to vector<1x4xf32>
    %26 = vector.extract_strided_slice %24 {offsets = [0, 4], sizes = [1, 1], strides = [1, 1]} : vector<1x5xf32> to vector<1x1xf32>
    %c0_17 = arith.constant 0 : index
    %c0_18 = arith.constant 0 : index
    %27 = vector.load %arg2[%c0_17, %c0_18] : memref<8x4xf32, #tpu.memory_space<vmem>>, vector<8x4xf32>
    %28 = arith.subf %27, %22 : vector<8x4xf32>
    %29 = arith.mulf %28, %28 : vector<8x4xf32>
    %30 = vector.broadcast %25 : vector<1x4xf32> to vector<8x4xf32>
    %31 = arith.mulf %29, %30 : vector<8x4xf32>
    %cst_19 = arith.constant dense<0.000000e+00> : vector<8xf32>
    %32 = vector.multi_reduction <add>, %31, %cst_19 [1] : vector<8x4xf32> to vector<8xf32>
    %33 = vector.shape_cast %32 : vector<8xf32> to vector<8x1xf32>
    %cst_20 = arith.constant 5.000000e-01 : f32
    %34 = vector.broadcast %cst_20 : f32 to vector<8x1xf32>
    %35 = arith.mulf %34, %33 : vector<8x1xf32>
    %36 = vector.broadcast %26 : vector<1x1xf32> to vector<8x1xf32>
    %37 = arith.subf %36, %35 : vector<8x1xf32>
    %c0_21 = arith.constant 0 : index
    %c0_22 = arith.constant 0 : index
    %38 = vector.load %arg10[%c0_21, %c0_22] : memref<8x2xf32, #tpu.memory_space<vmem>>, vector<8x1xf32>
    tpu.vector_store %arg10[%c0_21, %c0_22], %37 {strides = array<i32>} : memref<8x2xf32, #tpu.memory_space<vmem>>, vector<8x1xf32>,
    %c0_23 = arith.constant 0 : index
    %c1 = arith.constant 1 : index
    %39 = vector.load %arg10[%c0_23, %c1] : memref<8x2xf32, #tpu.memory_space<vmem>>, vector<8x1xf32>
    tpu.vector_store %arg10[%c0_23, %c1], %23 {strides = array<i32>} : memref<8x2xf32, #tpu.memory_space<vmem>>, vector<8x1xf32>,
    return
  }
  func.func @transform_0(%arg0: i32) -> (i32, i32) {
    %c0_i32 = arith.constant 0 : i32
    %c0_i32_0 = arith.constant 0 : i32
    return %arg0, %c0_i32 : i32, i32
  }
  func.func @transform_1(%arg0: i32) -> (i32, i32) {
    %c0_i32 = arith.constant 0 : i32
    %c0_i32_0 = arith.constant 0 : i32
    return %arg0, %c0_i32 : i32, i32
  }
  func.func @transform_2(%arg0: i32) -> (i32, i32) {
    %c0_i32 = arith.constant 0 : i32
    %c0_i32_0 = arith.constant 0 : i32
    %c0_i32_1 = arith.constant 0 : i32
    return %c0_i32, %c0_i32_0 : i32, i32
  }
  func.func @transform_3(%arg0: i32) -> (i32, i32) {
    %c0_i32 = arith.constant 0 : i32
    %c0_i32_0 = arith.constant 0 : i32
    %c0_i32_1 = arith.constant 0 : i32
    return %c0_i32, %c0_i32_0 : i32, i32
  }
  func.func @transform_4(%arg0: i32) -> (i32, i32) {
    %c0_i32 = arith.constant 0 : i32
    %c0_i32_0 = arith.constant 0 : i32
    %c0_i32_1 = arith.constant 0 : i32
    return %c0_i32, %c0_i32_0 : i32, i32
  }
  func.func @transform_5(%arg0: i32) -> (i32, i32) {
    %c0_i32 = arith.constant 0 : i32
    %c0_i32_0 = arith.constant 0 : i32
    %c0_i32_1 = arith.constant 0 : i32
    return %c0_i32, %c0_i32_0 : i32, i32
  }
  func.func @transform_6(%arg0: i32) -> (i32, i32) {
    %c0_i32 = arith.constant 0 : i32
    %c0_i32_0 = arith.constant 0 : i32
    %c0_i32_1 = arith.constant 0 : i32
    return %c0_i32, %c0_i32_0 : i32, i32
  }
  func.func @transform_7(%arg0: i32) -> (i32, i32) {
    %c0_i32 = arith.constant 0 : i32
    %c0_i32_0 = arith.constant 0 : i32
    %c0_i32_1 = arith.constant 0 : i32
    return %c0_i32, %c0_i32_0 : i32, i32
  }
  func.func @transform_8(%arg0: i32) -> (i32, i32) {
    %c0_i32 = arith.constant 0 : i32
    %c0_i32_0 = arith.constant 0 : i32
    %c0_i32_1 = arith.constant 0 : i32
    return %c0_i32, %c0_i32_0 : i32, i32
  }
  func.func @transform_9(%arg0: i32) -> (i32, i32) {
    %c0_i32 = arith.constant 0 : i32
    %c0_i32_0 = arith.constant 0 : i32
    return %arg0, %c0_i32 : i32, i32
  }
}

</mosaic_0001>

<llo_original>
// kernel: evaluate.1
$region0: #{evaluate.1}
  #allocation0 [shape = 'u32[]', space=smem, size = 0x4, offset = 0x4, fixed_abs, tag = 'smem constant byte address 0x4 - core index']
  #allocation1 [shape = 'u32[144,128]{1,0:T(1,128)}', space=vmem, size = 0x12000, scoped, tag = 'internal scratch']
  %s0 = inlined_call_operand.vmem [shape: f32[8,16], index: 0, kind: input, shape index: {}]
  %s1 = inlined_call_operand.vmem [shape: f32[8,4], index: 1, kind: input, shape index: {}]
  %s2 = inlined_call_operand.vmem [shape: bf16[16,128], index: 2, kind: input, shape index: {}]
  %s3 = inlined_call_operand.vmem [shape: f32[1,128], index: 3, kind: input, shape index: {}]
  %s4 = inlined_call_operand.vmem [shape: bf16[128,128], index: 4, kind: input, shape index: {}]
  %s5 = inlined_call_operand.vmem [shape: f32[1,128], index: 5, kind: input, shape index: {}]
  %s6 = inlined_call_operand.vmem [shape: bf16[128,5], index: 6, kind: input, shape index: {}]
  %s7 = inlined_call_operand.vmem [shape: f32[1,5], index: 7, kind: input, shape index: {}]
  %s8 = inlined_call_operand.vmem [shape: f32[1,5], index: 8, kind: input, shape index: {}]
  %s9 = inlined_call_operand.vmem [shape: f32[8,2], index: 9, kind: output, shape index: {}]
  %s10 = sld [smem:[#allocation0]]
  $region46: #{evaluate.1} parent=0
    _
  %s12 = ssub.s32 1, %s10
  %s13 = scalar_select 0, %s12, %s10
  // Predicated region
  $region2: #{evaluate.1} parent=0 // pred_check
    _
  $region3: #{evaluate.1} parent=0 // pred_check_branch
    %15 = sbr.rel (0) target = $region5
  $region4: #{evaluate.1} parent=0 // pred_region
    _
  $region5: #{evaluate.1} parent=0 // pred_fallthru
    _
  // Predicated region
  $region6: #{evaluate.1} parent=0 // pred_check
    _
  $region7: #{evaluate.1} parent=0 // pred_check_branch
    %17 = sbr.rel (0) target = $region9
  $region8: #{evaluate.1} parent=0 // pred_region
    _
  $region9: #{evaluate.1} parent=0 // pred_fallthru
    _
  // Predicated region
  $region10: #{evaluate.1} parent=0 // pred_check
    _
  $region11: #{evaluate.1} parent=0 // pred_check_branch
    %19 = sbr.rel (0) target = $region13
  $region12: #{evaluate.1} parent=0 // pred_region
    _
  $region13: #{evaluate.1} parent=0 // pred_fallthru
    _
  // Predicated region
  $region14: #{evaluate.1} parent=0 // pred_check
    _
  $region15: #{evaluate.1} parent=0 // pred_check_branch
    %21 = sbr.rel (0) target = $region17
  $region16: #{evaluate.1} parent=0 // pred_region
    _
  $region17: #{evaluate.1} parent=0 // pred_fallthru
    _
  // Predicated region
  $region18: #{evaluate.1} parent=0 // pred_check
    _
  $region19: #{evaluate.1} parent=0 // pred_check_branch
    %23 = sbr.rel (0) target = $region21
  $region20: #{evaluate.1} parent=0 // pred_region
    _
  $region21: #{evaluate.1} parent=0 // pred_fallthru
    _
  // Predicated region
  $region22: #{evaluate.1} parent=0 // pred_check
    _
  $region23: #{evaluate.1} parent=0 // pred_check_branch
    %25 = sbr.rel (0) target = $region25
  $region24: #{evaluate.1} parent=0 // pred_region
    _
  $region25: #{evaluate.1} parent=0 // pred_fallthru
    _
  // Predicated region
  $region26: #{evaluate.1} parent=0 // pred_check
    _
  $region27: #{evaluate.1} parent=0 // pred_check_branch
    %27 = sbr.rel (0) target = $region29
  $region28: #{evaluate.1} parent=0 // pred_region
    _
  $region29: #{evaluate.1} parent=0 // pred_fallthru
    _
  // Predicated region
  $region30: #{evaluate.1} parent=0 // pred_check
    _
  $region31: #{evaluate.1} parent=0 // pred_check_branch
    %29 = sbr.rel (0) target = $region33
  $region32: #{evaluate.1} parent=0 // pred_region
    _
  $region33: #{evaluate.1} parent=0 // pred_fallthru
    _
  // Predicated region
  $region34: #{evaluate.1} parent=0 // pred_check
    _
  $region35: #{evaluate.1} parent=0 // pred_check_branch
    %31 = sbr.rel (0) target = $region37
  $region36: #{evaluate.1} parent=0 // pred_region
    _
  $region37: #{evaluate.1} parent=0 // pred_fallthru
    _
  %v33 = vld [vmem:[%s0] sm:$0xff]
  %v34 = vpack.c.bf16 %v33, %v33
  %v35 = vld [vmem:[%s2] sm:$0xf]
  %v36 = vld [vmem:[%s2 + $0x4] sm:$0xf]
  %v37 = vld [vmem:[%s3] sm:$0x1]
  %v39 = vlaneseq
  %v40 = vshrl.u32 %v39, 7
  %v41 = vsub.s32 0, %v40
  %v42 = vrot.slane %v37, %v41
  %v46 = vunpack.c.l.b16 %v35
  %v47 = vunpack.c.l.b16 %v36
  %v48 = vpack.c.b16 %v47, %v46
  %vm50 = vcmask 130048
  %v52 = vsel %vm50, %v34, 0
  %54 = vmatprep.subr.bf16.mxu0 0
  %55 = vmatpush1.bf16.msra.mxu0 %v48
  %56 = vmatprep.subr.bf16.mxu0 0
  %57 = vmatpush1.bf16.msra.mxu0 0
  %58 = vmatprep.subr.bf16.mxu0 0
  %59 = vmatpush1.bf16.msra.mxu0 0
  %60 = vmatprep.subr.bf16.mxu0 0
  %61 = vmatpush1.bf16.msra.mxu0 0
  %62 = vmatprep.subr.bf16.mxu0 0
  %63 = vmatpush1.bf16.msra.mxu0 0
  %64 = vmatprep.subr.bf16.mxu0 0
  %65 = vmatpush1.bf16.msra.mxu0 0
  %66 = vmatprep.subr.bf16.mxu0 0
  %67 = vmatpush1.bf16.msra.mxu0 0
  %68 = vmatprep.subr.bf16.mxu0 0
  %69 = vmatpush1.bf16.msra.mxu0 0
  %70 = vmatprep.subr.bf16.mxu0 0
  %71 = vmatpush1.bf16.msra.mxu0 0
  %72 = vmatprep.subr.bf16.mxu0 0
  %73 = vmatpush1.bf16.msra.mxu0 0
  %74 = vmatprep.subr.bf16.mxu0 0
  %75 = vmatpush1.bf16.msra.mxu0 0
  %76 = vmatprep.subr.bf16.mxu0 0
  %77 = vmatpush1.bf16.msra.mxu0 0
  %78 = vmatprep.subr.bf16.mxu0 0
  %79 = vmatpush1.bf16.msra.mxu0 0
  %80 = vmatprep.subr.bf16.mxu0 0
  %81 = vmatpush1.bf16.msra.mxu0 0
  %82 = vmatprep.subr.bf16.mxu0 0
  %83 = vmatpush1.bf16.msra.mxu0 0
  %84 = vmatprep.subr.bf16.mxu0 0
  %85 = vmatpush1.bf16.msra.mxu0 0
  %86 = vmatprep.mubr.bf16.mxu0 0
  %87 = vmatmul.mubr.bf16.gmra.mrb[0].mxu0 %v52
  %v88 = vpop.f32.mrb[0].mxu0
  %v89 = vadd.f32 %v42, %v88
  %v90 = vpop.f32.mrb[0].mxu0
  %v91 = vpop.f32.mrb[0].mxu0
  %v92 = vpop.f32.mrb[0].mxu0
  %93 = vdwg.mxu0
  %v94 = vtanh.pop %v89
  %v95 = vpack.c.bf16 %v94, %v94
  %v96 = vld [vmem:[%s4] sm:$0xf]
  %v97 = vld [vmem:[%s4 + $0x4] sm:$0xf]
  %v98 = vld [vmem:[%s4 + $0x8] sm:$0xf]
  %v99 = vld [vmem:[%s4 + $0xc] sm:$0xf]
  %v100 = vld [vmem:[%s4 + $0x10] sm:$0xf]
  %v101 = vld [vmem:[%s4 + $0x14] sm:$0xf]
  %v102 = vld [vmem:[%s4 + $0x18] sm:$0xf]
  %v103 = vld [vmem:[%s4 + $0x1c] sm:$0xf]
  %v104 = vld [vmem:[%s4 + $0x20] sm:$0xf]
  %v105 = vld [vmem:[%s4 + $0x24] sm:$0xf]
  %v106 = vld [vmem:[%s4 + $0x28] sm:$0xf]
  %v107 = vld [vmem:[%s4 + $0x2c] sm:$0xf]
  %v108 = vld [vmem:[%s4 + $0x30] sm:$0xf]
  %v109 = vld [vmem:[%s4 + $0x34] sm:$0xf]
  %v110 = vld [vmem:[%s4 + $0x38] sm:$0xf]
  %v111 = vld [vmem:[%s4 + $0x3c] sm:$0xf]
  %v112 = vld [vmem:[%s5] sm:$0x1]
  %v114 = vlaneseq
  %v115 = vshrl.u32 %v114, 7
  %v116 = vsub.s32 0, %v115
  %v117 = vrot.slane %v112, %v116
  %v135 = vunpack.c.l.b16 %v96
  %v136 = vunpack.c.l.b16 %v97
  %v137 = vunpack.c.l.b16 %v98
  %v138 = vunpack.c.l.b16 %v99
  %v139 = vunpack.c.l.b16 %v100
  %v140 = vunpack.c.l.b16 %v101
  %v141 = vunpack.c.l.b16 %v102
  %v142 = vunpack.c.l.b16 %v103
  %v143 = vunpack.c.l.b16 %v104
  %v144 = vunpack.c.l.b16 %v105
  %v145 = vunpack.c.l.b16 %v106
  %v146 = vunpack.c.l.b16 %v107
  %v147 = vunpack.c.l.b16 %v108
  %v148 = vunpack.c.l.b16 %v109
  %v149 = vunpack.c.l.b16 %v110
  %v150 = vunpack.c.l.b16 %v111
  %v151 = vpack.c.b16 %v136, %v135
  %v152 = vpack.c.b16 %v138, %v137
  %v153 = vpack.c.b16 %v140, %v139
  %v154 = vpack.c.b16 %v142, %v141
  %v155 = vpack.c.b16 %v144, %v143
  %v156 = vpack.c.b16 %v146, %v145
  %v157 = vpack.c.b16 %v148, %v147
  %v158 = vpack.c.b16 %v150, %v149
  %167 = vmatprep.subr.bf16.mxu0 0
  %168 = vmatpush1.bf16.msra.mxu0 %v151
  %169 = vmatprep.subr.bf16.mxu0 0
  %170 = vmatpush1.bf16.msra.mxu0 %v152
  %171 = vmatprep.subr.bf16.mxu0 0
  %172 = vmatpush1.bf16.msra.mxu0 %v153
  %173 = vmatprep.subr.bf16.mxu0 0
  %174 = vmatpush1.bf16.msra.mxu0 %v154
  %175 = vmatprep.subr.bf16.mxu0 0
  %176 = vmatpush1.bf16.msra.mxu0 %v155
  %177 = vmatprep.subr.bf16.mxu0 0
  %178 = vmatpush1.bf16.msra.mxu0 %v156
  %179 = vmatprep.subr.bf16.mxu0 0
  %180 = vmatpush1.bf16.msra.mxu0 %v157
  %181 = vmatprep.subr.bf16.mxu0 0
  %182 = vmatpush1.bf16.msra.mxu0 %v158
  %183 = vmatprep.subr.bf16.mxu0 0
  %184 = vmatpush1.bf16.msra.mxu0 0
  %185 = vmatprep.subr.bf16.mxu0 0
  %186 = vmatpush1.bf16.msra.mxu0 0
  %187 = vmatprep.subr.bf16.mxu0 0
  %188 = vmatpush1.bf16.msra.mxu0 0
  %189 = vmatprep.subr.bf16.mxu0 0
  %190 = vmatpush1.bf16.msra.mxu0 0
  %191 = vmatprep.subr.bf16.mxu0 0
  %192 = vmatpush1.bf16.msra.mxu0 0
  %193 = vmatprep.subr.bf16.mxu0 0
  %194 = vmatpush1.bf16.msra.mxu0 0
  %195 = vmatprep.subr.bf16.mxu0 0
  %196 = vmatpush1.bf16.msra.mxu0 0
  %197 = vmatprep.subr.bf16.mxu0 0
  %198 = vmatpush1.bf16.msra.mxu0 0
  %199 = vmatprep.mubr.bf16.mxu0 0
  %200 = vmatmul.mubr.bf16.gmra.mrb[0].mxu0 %v95
  %v201 = vpop.f32.mrb[0].mxu0
  %v202 = vadd.f32 %v117, %v201
  %v203 = vpop.f32.mrb[0].mxu0
  %v204 = vpop.f32.mrb[0].mxu0
  %v205 = vpop.f32.mrb[0].mxu0
  %206 = vdwg.mxu0
  %v207 = vtanh.pop %v202
  %v208 = vpack.c.bf16 %v207, %v207
  %v209 = vld [vmem:[%s6] sm:$0xf]
  %v210 = vld [vmem:[%s6 + $0x4] sm:$0xf]
  %v211 = vld [vmem:[%s6 + $0x8] sm:$0xf]
  %v212 = vld [vmem:[%s6 + $0xc] sm:$0xf]
  %v213 = vld [vmem:[%s6 + $0x10] sm:$0xf]
  %v214 = vld [vmem:[%s6 + $0x14] sm:$0xf]
  %v215 = vld [vmem:[%s6 + $0x18] sm:$0xf]
  %v216 = vld [vmem:[%s6 + $0x1c] sm:$0xf]
  %v217 = vld [vmem:[%s6 + $0x20] sm:$0xf]
  %v218 = vld [vmem:[%s6 + $0x24] sm:$0xf]
  %v219 = vld [vmem:[%s6 + $0x28] sm:$0xf]
  %v220 = vld [vmem:[%s6 + $0x2c] sm:$0xf]
  %v221 = vld [vmem:[%s6 + $0x30] sm:$0xf]
  %v222 = vld [vmem:[%s6 + $0x34] sm:$0xf]
  %v223 = vld [vmem:[%s6 + $0x38] sm:$0xf]
  %v224 = vld [vmem:[%s6 + $0x3c] sm:$0xf]
  %v225 = vld [vmem:[%s7] sm:$0x1]
  %v227 = vlaneseq
  %v228 = vshrl.u32 %v227, 7
  %v229 = vsub.s32 0, %v228
  %v230 = vrot.slane %v225, %v229
  %v248 = vunpack.c.l.b16 %v209
  %v249 = vunpack.c.l.b16 %v210
  %v250 = vunpack.c.l.b16 %v211
  %v251 = vunpack.c.l.b16 %v212
  %v252 = vunpack.c.l.b16 %v213
  %v253 = vunpack.c.l.b16 %v214
  %v254 = vunpack.c.l.b16 %v215
  %v255 = vunpack.c.l.b16 %v216
  %v256 = vunpack.c.l.b16 %v217
  %v257 = vunpack.c.l.b16 %v218
  %v258 = vunpack.c.l.b16 %v219
  %v259 = vunpack.c.l.b16 %v220
  %v260 = vunpack.c.l.b16 %v221
  %v261 = vunpack.c.l.b16 %v222
  %v262 = vunpack.c.l.b16 %v223
  %v263 = vunpack.c.l.b16 %v224
  %v264 = vpack.c.b16 %v249, %v248
  %v265 = vpack.c.b16 %v251, %v250
  %v266 = vpack.c.b16 %v253, %v252
  %v267 = vpack.c.b16 %v255, %v254
  %v268 = vpack.c.b16 %v257, %v256
  %v269 = vpack.c.b16 %v259, %v258
  %v270 = vpack.c.b16 %v261, %v260
  %v271 = vpack.c.b16 %v263, %v262
  %280 = vmatprep.subr.bf16.mxu0 0
  %281 = vmatpush1.bf16.msra.mxu0 %v264
  %282 = vmatprep.subr.bf16.mxu0 0
  %283 = vmatpush1.bf16.msra.mxu0 %v265
  %284 = vmatprep.subr.bf16.mxu0 0
  %285 = vmatpush1.bf16.msra.mxu0 %v266
  %286 = vmatprep.subr.bf16.mxu0 0
  %287 = vmatpush1.bf16.msra.mxu0 %v267
  %288 = vmatprep.subr.bf16.mxu0 0
  %289 = vmatpush1.bf16.msra.mxu0 %v268
  %290 = vmatprep.subr.bf16.mxu0 0
  %291 = vmatpush1.bf16.msra.mxu0 %v269
  %292 = vmatprep.subr.bf16.mxu0 0
  %293 = vmatpush1.bf16.msra.mxu0 %v270
  %294 = vmatprep.subr.bf16.mxu0 0
  %295 = vmatpush1.bf16.msra.mxu0 %v271
  %296 = vmatprep.subr.bf16.mxu0 0
  %297 = vmatpush1.bf16.msra.mxu0 0
  %298 = vmatprep.subr.bf16.mxu0 0
  %299 = vmatpush1.bf16.msra.mxu0 0
  %300 = vmatprep.subr.bf16.mxu0 0
  %301 = vmatpush1.bf16.msra.mxu0 0
  %302 = vmatprep.subr.bf16.mxu0 0
  %303 = vmatpush1.bf16.msra.mxu0 0
  %304 = vmatprep.subr.bf16.mxu0 0
  %305 = vmatpush1.bf16.msra.mxu0 0
  %306 = vmatprep.subr.bf16.mxu0 0
  %307 = vmatpush1.bf16.msra.mxu0 0
  %308 = vmatprep.subr.bf16.mxu0 0
  %309 = vmatpush1.bf16.msra.mxu0 0
  %310 = vmatprep.subr.bf16.mxu0 0
  %311 = vmatpush1.bf16.msra.mxu0 0
  %312 = vmatprep.mubr.bf16.mxu0 0
  %313 = vmatmul.mubr.bf16.gmra.mrb[0].mxu0 %v208
  %v314 = vpop.f32.mrb[0].mxu0
  %v315 = vadd.f32 %v230, %v314
  %v316 = vpop.f32.mrb[0].mxu0
  %v317 = vpop.f32.mrb[0].mxu0
  %v318 = vpop.f32.mrb[0].mxu0
  %319 = vdwg.mxu0
  %v320 = vtanh.pop %v315
  %v321 = vld [vmem:[%s8] sm:$0x1]
  %v322 = vld [vmem:[%s1] sm:$0xff]
  %v323 = vsub.f32 %v322, %v320
  %v324 = vmul.f32 %v323, %v323
  %v326 = vlaneseq
  %v327 = vshrl.u32 %v326, 7
  %v328 = vsub.s32 0, %v327
  %v329 = vrot.slane %v321, %v328
  %v331 = vmul.f32 %v324, %v329
  %vm332 = vcmask 31744
  %v333 = vsel %vm332, %v331, 0.0
  %334 = vadd.xlane.f32.xlu0 %v333
  %v335 = vpop.xlane.xlu0 %334
  %v336 = vmul.f32 %v335, 0.5
  %v337 = vsub.f32 %v329, %v336
  %339 = vrot.lane.b32.xlu0 %v337, 124
  %v340 = vpop.permute.xlu0 %339
  %vm342 = vcmask 7168
  %343 = vst.msk [vmem:[%s9] sm:$0xff] %vm342, %v340
  %345 = vrot.lane.b32.xlu0 %v315, 125
  %v346 = vpop.permute.xlu0 %345
  %vm348 = vcmask 15368
  %349 = vst.msk [vmem:[%s9] sm:$0xff] %vm348, %v346
  // Predicated region
  $region38: #{evaluate.1} parent=0 // pred_check
    _
  $region39: #{evaluate.1} parent=0 // pred_check_branch
    %351 = sbr.rel (0) target = $region41
  $region40: #{evaluate.1} parent=0 // pred_region
    _
  $region41: #{evaluate.1} parent=0 // pred_fallthru
    _
  // Predicated region
  $region42: #{evaluate.1} parent=0 // pred_check
    _
  $region43: #{evaluate.1} parent=0 // pred_check_branch
    %353 = sbr.rel (0) target = $region45
  $region44: #{evaluate.1} parent=0 // pred_region
    _
  $region45: #{evaluate.1} parent=0 // pred_fallthru
    _

</llo_original>
